<compile_context>
chip_gen: v5e
topology: v5e:2x2
jax: 0.10.0
libtpu: 0.0.40
codegen_flags: <defaults>
</compile_context>

<pallas_src>
import functools

import jax
import jax.numpy as jnp
from jax.experimental import pallas as pl
from jax.experimental.pallas import tpu as pltpu


def _round_up(x, m):
    return (x + m - 1) // m * m


def _default_use_bf16():
    """bf16 MXU operands pay off on v6e/v7x; keep f32 on v5e and older."""
    try:
        kind = jax.devices()[0].device_kind.lower()
    except Exception:
        return False
    return any(tag in kind for tag in ("v6", "v7", "7x"))


def mlp3_kernel(data_ref, wefg_ref, befg_ref, w1_ref, b1_ref, w2_ref, b2_ref,
                out_ref):
    """One feature-major batch tile of MLPModel3's forward.

    data_ref : (3, TM)      -- rows are E, F, I
    wefg_ref : (64, 3)      -- stacked Linear(1,64) weights (cols: E, F, G)
    befg_ref : (64, 3)      -- stacked biases
    w1_ref   : (64, 192)    -- fc1 weight (PyTorch (out, in) layout)
    b1_ref   : (64, 1)
    w2_ref   : (OD, 64)     -- fc2 weight
    b2_ref   : (OD, 1)
    out_ref  : (OD, TM)     -- dense, lane-major over the batch
    """
    data = data_ref[...]                       # (3, TM)
    wefg = wefg_ref[...]                       # (64, 3)
    befg = befg_ref[...]                       # (64, 3)

    # Linear(1, 64) == outer product (64,1)*(1,TM) + bias, then ReLU (VPU work).
    x_e = jnp.maximum(wefg[:, 0:1] * data[0:1, :] + befg[:, 0:1], 0.0)  # (64, TM)
    x_f = jnp.maximum(wefg[:, 1:2] * data[1:2, :] + befg[:, 1:2], 0.0)
    x_g = jnp.maximum(wefg[:, 2:3] * data[2:3, :] + befg[:, 2:3], 0.0)

    # Feature axis = sublane axis and 64 is 8-aligned, so this concat is a plain
    # sublane-aligned copy (no cross-lane shuffles), feeding ONE K=192 MXU pass.
    x_all = jnp.concatenate([x_e, x_f, x_g], axis=0)                    # (192, TM)

    mxu_dtype = w1_ref.dtype                                            # f32 or bf16
    z1 = jnp.dot(w1_ref[...], x_all.astype(mxu_dtype),
                 preferred_element_type=jnp.float32)
    z1 = jnp.maximum(z1 + b1_ref[...], 0.0)                             # (64, TM)

    out = jnp.dot(w2_ref[...], z1.astype(w2_ref.dtype),
                  preferred_element_type=jnp.float32)                   # (OD, TM)
    out_ref[...] = out + b2_ref[...]                                    # dense vst


@functools.partial(jax.jit, static_argnames=("tm", "use_bf16_mxu"))
def _mlp3_forward_impl(data, params, *, tm, use_bf16_mxu):
    B = data.shape[0]
    OD = params["W2"].shape[0]

    # --- host-side parameter packing (few, dense, VMEM-resident tiles) ------
    wefg = jnp.concatenate([params["wE"], params["wF"], params["wG"]], axis=1)  # (64, 3)
    befg = jnp.stack([params["bE"], params["bF"], params["bG"]], axis=1)        # (64, 3)
    w1 = params["W1"]                                                           # (64, 192)
    b1 = params["b1"].reshape(-1, 1)                                            # (64, 1)
    w2 = params["W2"]                                                           # (OD, 64)
    b2 = params["b2"].reshape(-1, 1)                                            # (OD, 1)

    if use_bf16_mxu:
        # v6e/v7x: bf16 MXU operands, f32 accumulation. Biases stay f32.
        w1 = w1.astype(jnp.bfloat16)
        w2 = w2.astype(jnp.bfloat16)

    # --- batch tiling (batch is the LANE axis -> TM multiple of 128) --------
    TM = min(_round_up(tm, 128), _round_up(max(B, 1), 128))
    Bp = _round_up(B, TM)

    # Transpose (and pad, when needed) in a single XLA pass: (B,3) -> (3,Bp).
    data_f32 = data.astype(jnp.float32)
    if Bp == B:
        data_t = data_f32.T
    else:
        data_t = jnp.zeros((3, Bp), jnp.float32).at[:, :B].set(data_f32.T)

    grid = (Bp // TM,)
    const = lambda i: (0, 0)   # weights/biases: constant block index -> stay in VMEM

    out_fm = pl.pallas_call(
        mlp3_kernel,
        out_shape=jax.ShapeDtypeStruct((OD, Bp), jnp.float32),
        grid=grid,
        in_specs=[
            pl.BlockSpec((3, TM), lambda i: (0, i)),      # data tile (pipelined, dense)
            pl.BlockSpec((64, 3), const),                 # wEFG
            pl.BlockSpec((64, 3), const),                 # bEFG
            pl.BlockSpec((64, 192), const),               # W1
            pl.BlockSpec((64, 1), const),                 # b1
            pl.BlockSpec((OD, 64), const),                # W2
            pl.BlockSpec((OD, 1), const),                 # b2
        ],
        out_specs=pl.BlockSpec((OD, TM), lambda i: (0, i)),
        compiler_params=pltpu.CompilerParams(
            # Batch axis is embarrassingly parallel. On v7x, sweeping
            # pltpu.CORE_PARALLEL here (2 TCs/chip) is a further option.
            dimension_semantics=("parallel",),
            vmem_limit_bytes=32 * 1024 * 1024,   # tiny tiles; far under v7x's 64 MiB
        ),
    )(data_t, wefg, befg, w1, b1, w2, b2)

    # (OD, Bp) -> (B, OD): OD*B elements only (32 B/row for OD=8), ~16x less
    # post-kernel traffic than the previous (Bp, 128)-padded output + slice.
    return out_fm[:, :B].T


def mlp_model3_forward(data, params, *, tm=1024, use_bf16_mxu=None):
    """Forward pass matching PyTorch MLPModel3.  use_bf16_mxu=None -> auto."""
    if use_bf16_mxu is None:
        use_bf16_mxu = _default_use_bf16()
    return _mlp3_forward_impl(data, params, tm=int(tm),
                              use_bf16_mxu=bool(use_bf16_mxu))


def init_params(key, output_dim):
    """Deterministic parameter init matching nn.Linear shapes ((out, in) layout)."""
    ks = jax.random.split(key, 10)

    def linear(kw, kb, fan_in, fan_out):
        bound = 1.0 / (fan_in ** 0.5)
        w = jax.random.uniform(kw, (fan_out, fan_in), jnp.float32, -bound, bound)
        b = jax.random.uniform(kb, (fan_out,), jnp.float32, -bound, bound)
        return w, b

    wE, bE = linear(ks[0], ks[1], 1, 64)
    wF, bF = linear(ks[2], ks[3], 1, 64)
    wG, bG = linear(ks[4], ks[5], 1, 64)
    W1, b1 = linear(ks[6], ks[7], 192, 64)
    W2, b2 = linear(ks[8], ks[9], 64, output_dim)
    return dict(wE=wE, bE=bE, wF=wF, bF=bF, wG=wG, bG=bG,
                W1=W1, b1=b1, W2=W2, b2=b2)


def reference_forward(data, p):
    """Pure-JAX reference replicating the PyTorch forward."""
    E = data[:, 0:1]
    F = data[:, 1:2]
    I = data[:, 2:3]
    relu = lambda x: jnp.maximum(x, 0.0)
    x_e = relu(E @ p["wE"].T + p["bE"])
    x_f = relu(F @ p["wF"].T + p["bF"])
    x_g = relu(I @ p["wG"].T + p["bG"])
    x_all = jnp.concatenate([x_e, x_f, x_g], axis=1)
    x = relu(x_all @ p["W1"].T + p["b1"])
    return x @ p["W2"].T + p["b2"]


if __name__ == "__main__":
    key = jax.random.PRNGKey(0)
    k_data, k_params = jax.random.split(key)

    B, IN_DIM, OUTPUT_DIM = 512, 3, 8
    data = jax.random.normal(k_data, (B, IN_DIM), dtype=jnp.float32)
    params = init_params(k_params, OUTPUT_DIM)
    ref = reference_forward(data, params)

    # f32 MXU path: tight tolerance.
    out_f32 = jax.block_until_ready(
        mlp_model3_forward(data, params, use_bf16_mxu=False))
    assert out_f32.shape == (B, OUTPUT_DIM)
    assert jnp.allclose(out_f32, ref, atol=1e-5, rtol=1e-5), "f32 mismatch vs reference"

    # Default (auto) path: bf16 MXU operands on v6e/v7x, f32 elsewhere.
    use_bf16 = _default_use_bf16()
    out_auto = jax.block_until_ready(mlp_model3_forward(data, params))
    tol = 3e-2 if use_bf16 else 1e-5
    assert out_auto.shape == (B, OUTPUT_DIM)
    assert jnp.allclose(out_auto, ref, atol=tol, rtol=tol), "auto-path mismatch vs reference"

    # Ragged / tiny batch path (B not a multiple of the tile / 128).
    data_small = data[:11]
    out_small = jax.block_until_ready(
        mlp_model3_forward(data_small, params, use_bf16_mxu=False))
    assert out_small.shape == (11, OUTPUT_DIM)
    assert jnp.allclose(out_small, ref[:11], atol=1e-5, rtol=1e-5), "ragged mismatch"

    print("KERNEL_OK")
</pallas_src>

<mosaic_0001>
module attributes {stable_mosaic.version = 11 : i64} {
  func.func @mlp3_kernel(%arg0: i32, %arg1: memref<3x512xf32, #tpu.memory_space<vmem>>, %arg2: memref<64x3xf32, #tpu.memory_space<vmem>>, %arg3: memref<64x3xf32, #tpu.memory_space<vmem>>, %arg4: memref<64x192xf32, #tpu.memory_space<vmem>>, %arg5: memref<64x1xf32, #tpu.memory_space<vmem>>, %arg6: memref<8x64xf32, #tpu.memory_space<vmem>>, %arg7: memref<8x1xf32, #tpu.memory_space<vmem>>, %arg8: memref<8x512xf32, #tpu.memory_space<vmem>>) attributes {dimension_semantics = [#tpu.dimension_semantics<parallel>], iteration_bounds = array<i64: 1>, scalar_prefetch = 0 : i64, scratch_operands = 0 : i64, tpu.core_type = #tpu.core_type<tc>, window_params = [{transform_indices = @transform_0, window_bounds = array<i64: 3, 512>}, {pipeline_mode = #tpu.pipeline_mode<synchronous>, transform_indices = @transform_1, window_bounds = array<i64: 64, 3>}, {pipeline_mode = #tpu.pipeline_mode<synchronous>, transform_indices = @transform_2, window_bounds = array<i64: 64, 3>}, {pipeline_mode = #tpu.pipeline_mode<synchronous>, transform_indices = @transform_3, window_bounds = array<i64: 64, 192>}, {pipeline_mode = #tpu.pipeline_mode<synchronous>, transform_indices = @transform_4, window_bounds = array<i64: 64, 1>}, {pipeline_mode = #tpu.pipeline_mode<synchronous>, transform_indices = @transform_5, window_bounds = array<i64: 8, 64>}, {pipeline_mode = #tpu.pipeline_mode<synchronous>, transform_indices = @transform_6, window_bounds = array<i64: 8, 1>}, {transform_indices = @transform_7, window_bounds = array<i64: 8, 512>}]} {
    %c0 = arith.constant 0 : index
    %c0_0 = arith.constant 0 : index
    %0 = vector.load %arg1[%c0, %c0_0] : memref<3x512xf32, #tpu.memory_space<vmem>>, vector<3x512xf32>
    %c0_1 = arith.constant 0 : index
    %c0_2 = arith.constant 0 : index
    %1 = vector.load %arg2[%c0_1, %c0_2] : memref<64x3xf32, #tpu.memory_space<vmem>>, vector<64x3xf32>
    %c0_3 = arith.constant 0 : index
    %c0_4 = arith.constant 0 : index
    %2 = vector.load %arg3[%c0_3, %c0_4] : memref<64x3xf32, #tpu.memory_space<vmem>>, vector<64x3xf32>
    %3 = vector.extract_strided_slice %1 {offsets = [0, 0], sizes = [64, 1], strides = [1, 1]} : vector<64x3xf32> to vector<64x1xf32>
    %4 = vector.extract_strided_slice %0 {offsets = [0, 0], sizes = [1, 512], strides = [1, 1]} : vector<3x512xf32> to vector<1x512xf32>
    %5 = vector.broadcast %3 : vector<64x1xf32> to vector<64x512xf32>
    %6 = vector.broadcast %4 : vector<1x512xf32> to vector<64x512xf32>
    %7 = arith.mulf %5, %6 : vector<64x512xf32>
    %8 = vector.extract_strided_slice %2 {offsets = [0, 0], sizes = [64, 1], strides = [1, 1]} : vector<64x3xf32> to vector<64x1xf32>
    %9 = vector.broadcast %8 : vector<64x1xf32> to vector<64x512xf32>
    %10 = arith.addf %7, %9 : vector<64x512xf32>
    %cst = arith.constant 0.000000e+00 : f32
    %11 = vector.broadcast %cst : f32 to vector<64x512xf32>
    %12 = arith.maximumf %10, %11 : vector<64x512xf32>
    %13 = vector.extract_strided_slice %1 {offsets = [0, 1], sizes = [64, 1], strides = [1, 1]} : vector<64x3xf32> to vector<64x1xf32>
    %14 = vector.extract_strided_slice %0 {offsets = [1, 0], sizes = [1, 512], strides = [1, 1]} : vector<3x512xf32> to vector<1x512xf32>
    %15 = vector.broadcast %13 : vector<64x1xf32> to vector<64x512xf32>
    %16 = vector.broadcast %14 : vector<1x512xf32> to vector<64x512xf32>
    %17 = arith.mulf %15, %16 : vector<64x512xf32>
    %18 = vector.extract_strided_slice %2 {offsets = [0, 1], sizes = [64, 1], strides = [1, 1]} : vector<64x3xf32> to vector<64x1xf32>
    %19 = vector.broadcast %18 : vector<64x1xf32> to vector<64x512xf32>
    %20 = arith.addf %17, %19 : vector<64x512xf32>
    %cst_5 = arith.constant 0.000000e+00 : f32
    %21 = vector.broadcast %cst_5 : f32 to vector<64x512xf32>
    %22 = arith.maximumf %20, %21 : vector<64x512xf32>
    %23 = vector.extract_strided_slice %1 {offsets = [0, 2], sizes = [64, 1], strides = [1, 1]} : vector<64x3xf32> to vector<64x1xf32>
    %24 = vector.extract_strided_slice %0 {offsets = [2, 0], sizes = [1, 512], strides = [1, 1]} : vector<3x512xf32> to vector<1x512xf32>
    %25 = vector.broadcast %23 : vector<64x1xf32> to vector<64x512xf32>
    %26 = vector.broadcast %24 : vector<1x512xf32> to vector<64x512xf32>
    %27 = arith.mulf %25, %26 : vector<64x512xf32>
    %28 = vector.extract_strided_slice %2 {offsets = [0, 2], sizes = [64, 1], strides = [1, 1]} : vector<64x3xf32> to vector<64x1xf32>
    %29 = vector.broadcast %28 : vector<64x1xf32> to vector<64x512xf32>
    %30 = arith.addf %27, %29 : vector<64x512xf32>
    %cst_6 = arith.constant 0.000000e+00 : f32
    %31 = vector.broadcast %cst_6 : f32 to vector<64x512xf32>
    %32 = arith.maximumf %30, %31 : vector<64x512xf32>
    %33 = tpu.concatenate %12, %22, %32 in 0 : vector<64x512xf32>, vector<64x512xf32>, vector<64x512xf32> -> vector<192x512xf32>
    %c0_7 = arith.constant 0 : index
    %c0_8 = arith.constant 0 : index
    %34 = vector.load %arg4[%c0_7, %c0_8] : memref<64x192xf32, #tpu.memory_space<vmem>>, vector<64x192xf32>
    %cst_9 = arith.constant dense<0.000000e+00> : vector<64x512xf32>
    %35 = tpu.matmul %34, %33, %cst_9 {dimension_numbers = #tpu.dot_dimension_numbers<[1], [0], [0], [1], [0, 0, 1, 1], [], []>} : vector<64x192xf32>, vector<192x512xf32>, vector<64x512xf32> -> vector<64x512xf32>
    %c0_10 = arith.constant 0 : index
    %c0_11 = arith.constant 0 : index
    %36 = vector.load %arg5[%c0_10, %c0_11] : memref<64x1xf32, #tpu.memory_space<vmem>>, vector<64x1xf32>
    %37 = vector.broadcast %36 : vector<64x1xf32> to vector<64x512xf32>
    %38 = arith.addf %35, %37 : vector<64x512xf32>
    %cst_12 = arith.constant 0.000000e+00 : f32
    %39 = vector.broadcast %cst_12 : f32 to vector<64x512xf32>
    %40 = arith.maximumf %38, %39 : vector<64x512xf32>
    %c0_13 = arith.constant 0 : index
    %c0_14 = arith.constant 0 : index
    %41 = vector.load %arg6[%c0_13, %c0_14] : memref<8x64xf32, #tpu.memory_space<vmem>>, vector<8x64xf32>
    %cst_15 = arith.constant dense<0.000000e+00> : vector<8x512xf32>
    %42 = tpu.matmul %41, %40, %cst_15 {dimension_numbers = #tpu.dot_dimension_numbers<[1], [0], [0], [1], [0, 0, 1, 1], [], []>} : vector<8x64xf32>, vector<64x512xf32>, vector<8x512xf32> -> vector<8x512xf32>
    %c0_16 = arith.constant 0 : index
    %c0_17 = arith.constant 0 : index
    %43 = vector.load %arg7[%c0_16, %c0_17] : memref<8x1xf32, #tpu.memory_space<vmem>>, vector<8x1xf32>
    %44 = vector.broadcast %43 : vector<8x1xf32> to vector<8x512xf32>
    %45 = arith.addf %42, %44 : vector<8x512xf32>
    %c0_18 = arith.constant 0 : index
    %c0_19 = arith.constant 0 : index
    %46 = vector.load %arg8[%c0_18, %c0_19] : memref<8x512xf32, #tpu.memory_space<vmem>>, vector<8x512xf32>
    tpu.vector_store %arg8[%c0_18, %c0_19], %45 {strides = array<i32>} : memref<8x512xf32, #tpu.memory_space<vmem>>, vector<8x512xf32>,
    return
  }
  func.func @transform_0(%arg0: i32) -> (i32, i32) {
    %c0_i32 = arith.constant 0 : i32
    %c0_i32_0 = arith.constant 0 : i32
    return %c0_i32, %arg0 : i32, i32
  }
  func.func @transform_1(%arg0: i32) -> (i32, i32) {
    %c0_i32 = arith.constant 0 : i32
    %c0_i32_0 = arith.constant 0 : i32
    %c0_i32_1 = arith.constant 0 : i32
    return %c0_i32, %c0_i32_0 : i32, i32
  }
  func.func @transform_2(%arg0: i32) -> (i32, i32) {
    %c0_i32 = arith.constant 0 : i32
    %c0_i32_0 = arith.constant 0 : i32
    %c0_i32_1 = arith.constant 0 : i32
    return %c0_i32, %c0_i32_0 : i32, i32
  }
  func.func @transform_3(%arg0: i32) -> (i32, i32) {
    %c0_i32 = arith.constant 0 : i32
    %c0_i32_0 = arith.constant 0 : i32
    %c0_i32_1 = arith.constant 0 : i32
    return %c0_i32, %c0_i32_0 : i32, i32
  }
  func.func @transform_4(%arg0: i32) -> (i32, i32) {
    %c0_i32 = arith.constant 0 : i32
    %c0_i32_0 = arith.constant 0 : i32
    %c0_i32_1 = arith.constant 0 : i32
    return %c0_i32, %c0_i32_0 : i32, i32
  }
  func.func @transform_5(%arg0: i32) -> (i32, i32) {
    %c0_i32 = arith.constant 0 : i32
    %c0_i32_0 = arith.constant 0 : i32
    %c0_i32_1 = arith.constant 0 : i32
    return %c0_i32, %c0_i32_0 : i32, i32
  }
  func.func @transform_6(%arg0: i32) -> (i32, i32) {
    %c0_i32 = arith.constant 0 : i32
    %c0_i32_0 = arith.constant 0 : i32
    %c0_i32_1 = arith.constant 0 : i32
    return %c0_i32, %c0_i32_0 : i32, i32
  }
  func.func @transform_7(%arg0: i32) -> (i32, i32) {
    %c0_i32 = arith.constant 0 : i32
    %c0_i32_0 = arith.constant 0 : i32
    return %c0_i32, %arg0 : i32, i32
  }
}

</mosaic_0001>

<llo_original>
// kernel: _mlp3_forward_impl.1
$region0: #{_mlp3_forward_impl.1}
  #allocation0 [shape = 'u32[]', space=smem, size = 0x4, offset = 0x4, fixed_abs, tag = 'smem constant byte address 0x4 - core index']
  #allocation1 [shape = 'u32[72,128]{1,0:T(1,128)}', space=vmem, size = 0x9000, scoped, tag = 'internal scratch']
  %s0 = inlined_call_operand.vmem [shape: f32[3,512], index: 0, kind: input, shape index: {}]
  %s1 = inlined_call_operand.vmem [shape: f32[64,3], index: 1, kind: input, shape index: {}]
  %s2 = inlined_call_operand.vmem [shape: f32[64,3], index: 2, kind: input, shape index: {}]
  %s3 = inlined_call_operand.vmem [shape: f32[64,192], index: 3, kind: input, shape index: {}]
  %s4 = inlined_call_operand.vmem [shape: f32[64,1], index: 4, kind: input, shape index: {}]
  %s5 = inlined_call_operand.vmem [shape: f32[8,64], index: 5, kind: input, shape index: {}]
  %s6 = inlined_call_operand.vmem [shape: f32[8,1], index: 6, kind: input, shape index: {}]
  %s7 = inlined_call_operand.hbm [shape: f32[8,512], index: 7, kind: output, shape index: {}]
  %s8 = sld [smem:[#allocation0]]
  $region38: #{_mlp3_forward_impl.1} parent=0
    _
  %s10 = ssub.s32 1, %s8
  %s11 = scalar_select 0, %s10, %s8
  $region1: #{_mlp3_forward_impl.1} parent=0
    #allocation2 [shape = 'u8[16384]{0}', space=vmem, size = 0x4000, scoped, tag = 'output window, operand 0, single buffered']
    #allocation3 [shape = 's32[1]{0}', space=sflag, size = 0x4, scoped, tag = 'scoped memory for _mlp3_forward_impl.1']
    %12 = vsyncpa [#allocation3], 0
    // Predicated region
    $region2: #{_mlp3_forward_impl.1} parent=1 // pred_check
      _
    $region3: #{_mlp3_forward_impl.1} parent=1 // pred_check_branch
      %14 = sbr.rel (0) target = $region5
    $region4: #{_mlp3_forward_impl.1} parent=1 // pred_region
      _
    $region5: #{_mlp3_forward_impl.1} parent=1 // pred_fallthru
      _
    // Predicated region
    $region6: #{_mlp3_forward_impl.1} parent=1 // pred_check
      _
    $region7: #{_mlp3_forward_impl.1} parent=1 // pred_check_branch
      %16 = sbr.rel (0) target = $region9
    $region8: #{_mlp3_forward_impl.1} parent=1 // pred_region
      _
    $region9: #{_mlp3_forward_impl.1} parent=1 // pred_fallthru
      _
    // Predicated region
    $region10: #{_mlp3_forward_impl.1} parent=1 // pred_check
      _
    $region11: #{_mlp3_forward_impl.1} parent=1 // pred_check_branch
      %18 = sbr.rel (0) target = $region13
    $region12: #{_mlp3_forward_impl.1} parent=1 // pred_region
      _
    $region13: #{_mlp3_forward_impl.1} parent=1 // pred_fallthru
      _
    // Predicated region
    $region14: #{_mlp3_forward_impl.1} parent=1 // pred_check
      _
    $region15: #{_mlp3_forward_impl.1} parent=1 // pred_check_branch
      %20 = sbr.rel (0) target = $region17
    $region16: #{_mlp3_forward_impl.1} parent=1 // pred_region
      _
    $region17: #{_mlp3_forward_impl.1} parent=1 // pred_fallthru
      _
    // Predicated region
    $region18: #{_mlp3_forward_impl.1} parent=1 // pred_check
      _
    $region19: #{_mlp3_forward_impl.1} parent=1 // pred_check_branch
      %22 = sbr.rel (0) target = $region21
    $region20: #{_mlp3_forward_impl.1} parent=1 // pred_region
      _
    $region21: #{_mlp3_forward_impl.1} parent=1 // pred_fallthru
      _
    // Predicated region
    $region22: #{_mlp3_forward_impl.1} parent=1 // pred_check
      _
    $region23: #{_mlp3_forward_impl.1} parent=1 // pred_check_branch
      %24 = sbr.rel (0) target = $region25
    $region24: #{_mlp3_forward_impl.1} parent=1 // pred_region
      _
    $region25: #{_mlp3_forward_impl.1} parent=1 // pred_fallthru
      _
    // Predicated region
    $region26: #{_mlp3_forward_impl.1} parent=1 // pred_check
      _
    $region27: #{_mlp3_forward_impl.1} parent=1 // pred_check_branch
      %26 = sbr.rel (0) target = $region29
    $region28: #{_mlp3_forward_impl.1} parent=1 // pred_region
      _
    $region29: #{_mlp3_forward_impl.1} parent=1 // pred_fallthru
      _
    %v27 = vld [vmem:[%s0] sm:$0x77]
    %v28 = vld [vmem:[%s0 + $0x8] sm:$0x77]
    %v29 = vld [vmem:[%s1] sm:$0xff]
    %v30 = vld [vmem:[%s1 + $0x8] sm:$0xff]
    %v31 = vld [vmem:[%s1 + $0x10] sm:$0xff]
    %v32 = vld [vmem:[%s1 + $0x18] sm:$0xff]
    %v33 = vld [vmem:[%s1 + $0x20] sm:$0xff]
    %v34 = vld [vmem:[%s1 + $0x28] sm:$0xff]
    %v35 = vld [vmem:[%s1 + $0x30] sm:$0xff]
    %v36 = vld [vmem:[%s1 + $0x38] sm:$0xff]
    %v37 = vld [vmem:[%s2] sm:$0xff]
    %v38 = vld [vmem:[%s2 + $0x8] sm:$0xff]
    %v39 = vld [vmem:[%s2 + $0x10] sm:$0xff]
    %v40 = vld [vmem:[%s2 + $0x18] sm:$0xff]
    %v41 = vld [vmem:[%s2 + $0x20] sm:$0xff]
    %v42 = vld [vmem:[%s2 + $0x28] sm:$0xff]
    %v43 = vld [vmem:[%s2 + $0x30] sm:$0xff]
    %v44 = vld [vmem:[%s2 + $0x38] sm:$0xff]
    %46 = vset.pattern.permute.xlu0 0
    %47 = vperm.xlu0 %46, %v29
    %v48 = vpop.permute.xlu0 %47
    %51 = vset.pattern.permute.xlu0 0
    %52 = vperm.xlu0 %51, %v30
    %v53 = vpop.permute.xlu0 %52
    %56 = vset.pattern.permute.xlu0 0
    %57 = vperm.xlu0 %56, %v31
    %v58 = vpop.permute.xlu0 %57
    %61 = vset.pattern.permute.xlu0 0
    %62 = vperm.xlu0 %61, %v32
    %v63 = vpop.permute.xlu0 %62
    %66 = vset.pattern.permute.xlu0 0
    %67 = vperm.xlu0 %66, %v33
    %v68 = vpop.permute.xlu0 %67
    %71 = vset.pattern.permute.xlu0 0
    %72 = vperm.xlu0 %71, %v34
    %v73 = vpop.permute.xlu0 %72
    %76 = vset.pattern.permute.xlu0 0
    %77 = vperm.xlu0 %76, %v35
    %v78 = vpop.permute.xlu0 %77
    %81 = vset.pattern.permute.xlu0 0
    %82 = vperm.xlu0 %81, %v36
    %v83 = vpop.permute.xlu0 %82
    %v87 = vperm.slane %v27, 0
    %v88 = vperm.slane %v27, 4
    %v89 = vperm.slane %v28, 0
    %v90 = vperm.slane %v28, 4
    %v95 = vperm.slane %v87, 0
    %v96 = vperm.slane %v88, 0
    %v97 = vperm.slane %v89, 0
    %v98 = vperm.slane %v90, 0
    %v99 = vmul.f32 %v48, %v95
    %v100 = vmul.f32 %v48, %v96
    %v101 = vmul.f32 %v48, %v97
    %v102 = vmul.f32 %v48, %v98
    %v103 = vmul.f32 %v53, %v95
    %v104 = vmul.f32 %v53, %v96
    %v105 = vmul.f32 %v53, %v97
    %v106 = vmul.f32 %v53, %v98
    %v107 = vmul.f32 %v58, %v95
    %v108 = vmul.f32 %v58, %v96
    %v109 = vmul.f32 %v58, %v97
    %v110 = vmul.f32 %v58, %v98
    %v111 = vmul.f32 %v63, %v95
    %v112 = vmul.f32 %v63, %v96
    %v113 = vmul.f32 %v63, %v97
    %v114 = vmul.f32 %v63, %v98
    %v115 = vmul.f32 %v68, %v95
    %v116 = vmul.f32 %v68, %v96
    %v117 = vmul.f32 %v68, %v97
    %v118 = vmul.f32 %v68, %v98
    %v119 = vmul.f32 %v73, %v95
    %v120 = vmul.f32 %v73, %v96
    %v121 = vmul.f32 %v73, %v97
    %v122 = vmul.f32 %v73, %v98
    %v123 = vmul.f32 %v78, %v95
    %v124 = vmul.f32 %v78, %v96
    %v125 = vmul.f32 %v78, %v97
    %v126 = vmul.f32 %v78, %v98
    %v127 = vmul.f32 %v83, %v95
    %v128 = vmul.f32 %v83, %v96
    %v129 = vmul.f32 %v83, %v97
    %v130 = vmul.f32 %v83, %v98
    %132 = vset.pattern.permute.xlu0 0
    %133 = vperm.xlu0 %132, %v37
    %v134 = vpop.permute.xlu0 %133
    %137 = vset.pattern.permute.xlu0 0
    %138 = vperm.xlu0 %137, %v38
    %v139 = vpop.permute.xlu0 %138
    %142 = vset.pattern.permute.xlu0 0
    %143 = vperm.xlu0 %142, %v39
    %v144 = vpop.permute.xlu0 %143
    %147 = vset.pattern.permute.xlu0 0
    %148 = vperm.xlu0 %147, %v40
    %v149 = vpop.permute.xlu0 %148
    %152 = vset.pattern.permute.xlu0 0
    %153 = vperm.xlu0 %152, %v41
    %v154 = vpop.permute.xlu0 %153
    %157 = vset.pattern.permute.xlu0 0
    %158 = vperm.xlu0 %157, %v42
    %v159 = vpop.permute.xlu0 %158
    %162 = vset.pattern.permute.xlu0 0
    %163 = vperm.xlu0 %162, %v43
    %v164 = vpop.permute.xlu0 %163
    %167 = vset.pattern.permute.xlu0 0
    %168 = vperm.xlu0 %167, %v44
    %v169 = vpop.permute.xlu0 %168
    %v171 = vadd.f32 %v99, %v134
    %v172 = vadd.f32 %v100, %v134
    %v173 = vadd.f32 %v101, %v134
    %v174 = vadd.f32 %v102, %v134
    %v175 = vadd.f32 %v103, %v139
    %v176 = vadd.f32 %v104, %v139
    %v177 = vadd.f32 %v105, %v139
    %v178 = vadd.f32 %v106, %v139
    %v179 = vadd.f32 %v107, %v144
    %v180 = vadd.f32 %v108, %v144
    %v181 = vadd.f32 %v109, %v144
    %v182 = vadd.f32 %v110, %v144
    %v183 = vadd.f32 %v111, %v149
    %v184 = vadd.f32 %v112, %v149
    %v185 = vadd.f32 %v113, %v149
    %v186 = vadd.f32 %v114, %v149
    %v187 = vadd.f32 %v115, %v154
    %v188 = vadd.f32 %v116, %v154
    %v189 = vadd.f32 %v117, %v154
    %v190 = vadd.f32 %v118, %v154
    %v191 = vadd.f32 %v119, %v159
    %v192 = vadd.f32 %v120, %v159
    %v193 = vadd.f32 %v121, %v159
    %v194 = vadd.f32 %v122, %v159
    %v195 = vadd.f32 %v123, %v164
    %v196 = vadd.f32 %v124, %v164
    %v197 = vadd.f32 %v125, %v164
    %v198 = vadd.f32 %v126, %v164
    %v199 = vadd.f32 %v127, %v169
    %v200 = vadd.f32 %v128, %v169
    %v201 = vadd.f32 %v129, %v169
    %v202 = vadd.f32 %v130, %v169
    %v203 = vmax.f32 %v171, 0.0
    %v204 = vmax.f32 %v172, 0.0
    %v205 = vmax.f32 %v173, 0.0
    %v206 = vmax.f32 %v174, 0.0
    %v207 = vmax.f32 %v175, 0.0
    %v208 = vmax.f32 %v176, 0.0
    %v209 = vmax.f32 %v177, 0.0
    %v210 = vmax.f32 %v178, 0.0
    %v211 = vmax.f32 %v179, 0.0
    %v212 = vmax.f32 %v180, 0.0
    %v213 = vmax.f32 %v181, 0.0
    %v214 = vmax.f32 %v182, 0.0
    %v215 = vmax.f32 %v183, 0.0
    %v216 = vmax.f32 %v184, 0.0
    %v217 = vmax.f32 %v185, 0.0
    %v218 = vmax.f32 %v186, 0.0
    %v219 = vmax.f32 %v187, 0.0
    %v220 = vmax.f32 %v188, 0.0
    %v221 = vmax.f32 %v189, 0.0
    %v222 = vmax.f32 %v190, 0.0
    %v223 = vmax.f32 %v191, 0.0
    %v224 = vmax.f32 %v192, 0.0
    %v225 = vmax.f32 %v193, 0.0
    %v226 = vmax.f32 %v194, 0.0
    %v227 = vmax.f32 %v195, 0.0
    %v228 = vmax.f32 %v196, 0.0
    %v229 = vmax.f32 %v197, 0.0
    %v230 = vmax.f32 %v198, 0.0
    %v231 = vmax.f32 %v199, 0.0
    %v232 = vmax.f32 %v200, 0.0
    %v233 = vmax.f32 %v201, 0.0
    %v234 = vmax.f32 %v202, 0.0
    %235 = vset.pattern.permute.xlu0 1
    %236 = vperm.xlu0 %235, %v29
    %v237 = vpop.permute.xlu0 %236
    %239 = vset.pattern.permute.xlu0 1
    %240 = vperm.xlu0 %239, %v30
    %v241 = vpop.permute.xlu0 %240
    %243 = vset.pattern.permute.xlu0 1
    %244 = vperm.xlu0 %243, %v31
    %v245 = vpop.permute.xlu0 %244
    %247 = vset.pattern.permute.xlu0 1
    %248 = vperm.xlu0 %247, %v32
    %v249 = vpop.permute.xlu0 %248
    %251 = vset.pattern.permute.xlu0 1
    %252 = vperm.xlu0 %251, %v33
    %v253 = vpop.permute.xlu0 %252
    %255 = vset.pattern.permute.xlu0 1
    %256 = vperm.xlu0 %255, %v34
    %v257 = vpop.permute.xlu0 %256
    %259 = vset.pattern.permute.xlu0 1
    %260 = vperm.xlu0 %259, %v35
    %v261 = vpop.permute.xlu0 %260
    %263 = vset.pattern.permute.xlu0 1
    %264 = vperm.xlu0 %263, %v36
    %v265 = vpop.permute.xlu0 %264
    %v267 = vperm.slane %v27, 1
    %v268 = vperm.slane %v27, 5
    %v269 = vperm.slane %v28, 1
    %v270 = vperm.slane %v28, 5
    %v275 = vperm.slane %v267, 1
    %v276 = vperm.slane %v268, 1
    %v277 = vperm.slane %v269, 1
    %v278 = vperm.slane %v270, 1
    %v279 = vmul.f32 %v237, %v275
    %v280 = vmul.f32 %v237, %v276
    %v281 = vmul.f32 %v237, %v277
    %v282 = vmul.f32 %v237, %v278
    %v283 = vmul.f32 %v241, %v275
    %v284 = vmul.f32 %v241, %v276
    %v285 = vmul.f32 %v241, %v277
    %v286 = vmul.f32 %v241, %v278
    %v287 = vmul.f32 %v245, %v275
    %v288 = vmul.f32 %v245, %v276
    %v289 = vmul.f32 %v245, %v277
    %v290 = vmul.f32 %v245, %v278
    %v291 = vmul.f32 %v249, %v275
    %v292 = vmul.f32 %v249, %v276
    %v293 = vmul.f32 %v249, %v277
    %v294 = vmul.f32 %v249, %v278
    %v295 = vmul.f32 %v253, %v275
    %v296 = vmul.f32 %v253, %v276
    %v297 = vmul.f32 %v253, %v277
    %v298 = vmul.f32 %v253, %v278
    %v299 = vmul.f32 %v257, %v275
    %v300 = vmul.f32 %v257, %v276
    %v301 = vmul.f32 %v257, %v277
    %v302 = vmul.f32 %v257, %v278
    %v303 = vmul.f32 %v261, %v275
    %v304 = vmul.f32 %v261, %v276
    %v305 = vmul.f32 %v261, %v277
    %v306 = vmul.f32 %v261, %v278
    %v307 = vmul.f32 %v265, %v275
    %v308 = vmul.f32 %v265, %v276
    %v309 = vmul.f32 %v265, %v277
    %v310 = vmul.f32 %v265, %v278
    %311 = vset.pattern.permute.xlu0 1
    %312 = vperm.xlu0 %311, %v37
    %v313 = vpop.permute.xlu0 %312
    %315 = vset.pattern.permute.xlu0 1
    %316 = vperm.xlu0 %315, %v38
    %v317 = vpop.permute.xlu0 %316
    %319 = vset.pattern.permute.xlu0 1
    %320 = vperm.xlu0 %319, %v39
    %v321 = vpop.permute.xlu0 %320
    %323 = vset.pattern.permute.xlu0 1
    %324 = vperm.xlu0 %323, %v40
    %v325 = vpop.permute.xlu0 %324
    %327 = vset.pattern.permute.xlu0 1
    %328 = vperm.xlu0 %327, %v41
    %v329 = vpop.permute.xlu0 %328
    %331 = vset.pattern.permute.xlu0 1
    %332 = vperm.xlu0 %331, %v42
    %v333 = vpop.permute.xlu0 %332
    %335 = vset.pattern.permute.xlu0 1
    %336 = vperm.xlu0 %335, %v43
    %v337 = vpop.permute.xlu0 %336
    %339 = vset.pattern.permute.xlu0 1
    %340 = vperm.xlu0 %339, %v44
    %v341 = vpop.permute.xlu0 %340
    %v343 = vadd.f32 %v279, %v313
    %v344 = vadd.f32 %v280, %v313
    %v345 = vadd.f32 %v281, %v313
    %v346 = vadd.f32 %v282, %v313
    %v347 = vadd.f32 %v283, %v317
    %v348 = vadd.f32 %v284, %v317
    %v349 = vadd.f32 %v285, %v317
    %v350 = vadd.f32 %v286, %v317
    %v351 = vadd.f32 %v287, %v321
    %v352 = vadd.f32 %v288, %v321
    %v353 = vadd.f32 %v289, %v321
    %v354 = vadd.f32 %v290, %v321
    %v355 = vadd.f32 %v291, %v325
    %v356 = vadd.f32 %v292, %v325
    %v357 = vadd.f32 %v293, %v325
    %v358 = vadd.f32 %v294, %v325
    %v359 = vadd.f32 %v295, %v329
    %v360 = vadd.f32 %v296, %v329
    %v361 = vadd.f32 %v297, %v329
    %v362 = vadd.f32 %v298, %v329
    %v363 = vadd.f32 %v299, %v333
    %v364 = vadd.f32 %v300, %v333
    %v365 = vadd.f32 %v301, %v333
    %v366 = vadd.f32 %v302, %v333
    %v367 = vadd.f32 %v303, %v337
    %v368 = vadd.f32 %v304, %v337
    %v369 = vadd.f32 %v305, %v337
    %v370 = vadd.f32 %v306, %v337
    %v371 = vadd.f32 %v307, %v341
    %v372 = vadd.f32 %v308, %v341
    %v373 = vadd.f32 %v309, %v341
    %v374 = vadd.f32 %v310, %v341
    %v375 = vmax.f32 %v343, 0.0
    %v376 = vmax.f32 %v344, 0.0
    %v377 = vmax.f32 %v345, 0.0
    %v378 = vmax.f32 %v346, 0.0
    %v379 = vmax.f32 %v347, 0.0
    %v380 = vmax.f32 %v348, 0.0
    %v381 = vmax.f32 %v349, 0.0
    %v382 = vmax.f32 %v350, 0.0
    %v383 = vmax.f32 %v351, 0.0
    %v384 = vmax.f32 %v352, 0.0
    %v385 = vmax.f32 %v353, 0.0
    %v386 = vmax.f32 %v354, 0.0
    %v387 = vmax.f32 %v355, 0.0
    %v388 = vmax.f32 %v356, 0.0
    %v389 = vmax.f32 %v357, 0.0
    %v390 = vmax.f32 %v358, 0.0
    %v391 = vmax.f32 %v359, 0.0
    %v392 = vmax.f32 %v360, 0.0
    %v393 = vmax.f32 %v361, 0.0
    %v394 = vmax.f32 %v362, 0.0
    %v395 = vmax.f32 %v363, 0.0
    %v396 = vmax.f32 %v364, 0.0
    %v397 = vmax.f32 %v365, 0.0
    %v398 = vmax.f32 %v366, 0.0
    %v399 = vmax.f32 %v367, 0.0
    %v400 = vmax.f32 %v368, 0.0
    %v401 = vmax.f32 %v369, 0.0
    %v402 = vmax.f32 %v370, 0.0
    %v403 = vmax.f32 %v371, 0.0
    %v404 = vmax.f32 %v372, 0.0
    %v405 = vmax.f32 %v373, 0.0
    %v406 = vmax.f32 %v374, 0.0
    %407 = vset.pattern.permute.xlu0 2
    %408 = vperm.xlu0 %407, %v29
    %v409 = vpop.permute.xlu0 %408
    %411 = vset.pattern.permute.xlu0 2
    %412 = vperm.xlu0 %411, %v30
    %v413 = vpop.permute.xlu0 %412
    %415 = vset.pattern.permute.xlu0 2
    %416 = vperm.xlu0 %415, %v31
    %v417 = vpop.permute.xlu0 %416
    %419 = vset.pattern.permute.xlu0 2
    %420 = vperm.xlu0 %419, %v32
    %v421 = vpop.permute.xlu0 %420
    %423 = vset.pattern.permute.xlu0 2
    %424 = vperm.xlu0 %423, %v33
    %v425 = vpop.permute.xlu0 %424
    %427 = vset.pattern.permute.xlu0 2
    %428 = vperm.xlu0 %427, %v34
    %v429 = vpop.permute.xlu0 %428
    %431 = vset.pattern.permute.xlu0 2
    %432 = vperm.xlu0 %431, %v35
    %v433 = vpop.permute.xlu0 %432
    %435 = vset.pattern.permute.xlu0 2
    %436 = vperm.xlu0 %435, %v36
    %v437 = vpop.permute.xlu0 %436
    %v439 = vperm.slane %v27, 2
    %v440 = vperm.slane %v27, 6
    %v441 = vperm.slane %v28, 2
    %v442 = vperm.slane %v28, 6
    %v447 = vperm.slane %v439, 2
    %v448 = vperm.slane %v440, 2
    %v449 = vperm.slane %v441, 2
    %v450 = vperm.slane %v442, 2
    %v451 = vmul.f32 %v409, %v447
    %v452 = vmul.f32 %v409, %v448
    %v453 = vmul.f32 %v409, %v449
    %v454 = vmul.f32 %v409, %v450
    %v455 = vmul.f32 %v413, %v447
    %v456 = vmul.f32 %v413, %v448
    %v457 = vmul.f32 %v413, %v449
    %v458 = vmul.f32 %v413, %v450
    %v459 = vmul.f32 %v417, %v447
    %v460 = vmul.f32 %v417, %v448
    %v461 = vmul.f32 %v417, %v449
    %v462 = vmul.f32 %v417, %v450
    %v463 = vmul.f32 %v421, %v447
    %v464 = vmul.f32 %v421, %v448
    %v465 = vmul.f32 %v421, %v449
    %v466 = vmul.f32 %v421, %v450
    %v467 = vmul.f32 %v425, %v447
    %v468 = vmul.f32 %v425, %v448
    %v469 = vmul.f32 %v425, %v449
    %v470 = vmul.f32 %v425, %v450
    %v471 = vmul.f32 %v429, %v447
    %v472 = vmul.f32 %v429, %v448
    %v473 = vmul.f32 %v429, %v449
    %v474 = vmul.f32 %v429, %v450
    %v475 = vmul.f32 %v433, %v447
    %v476 = vmul.f32 %v433, %v448
    %v477 = vmul.f32 %v433, %v449
    %v478 = vmul.f32 %v433, %v450
    %v479 = vmul.f32 %v437, %v447
    %v480 = vmul.f32 %v437, %v448
    %v481 = vmul.f32 %v437, %v449
    %v482 = vmul.f32 %v437, %v450
    %483 = vset.pattern.permute.xlu0 2
    %484 = vperm.xlu0 %483, %v37
    %v485 = vpop.permute.xlu0 %484
    %487 = vset.pattern.permute.xlu0 2
    %488 = vperm.xlu0 %487, %v38
    %v489 = vpop.permute.xlu0 %488
    %491 = vset.pattern.permute.xlu0 2
    %492 = vperm.xlu0 %491, %v39
    %v493 = vpop.permute.xlu0 %492
    %495 = vset.pattern.permute.xlu0 2
    %496 = vperm.xlu0 %495, %v40
    %v497 = vpop.permute.xlu0 %496
    %499 = vset.pattern.permute.xlu0 2
    %500 = vperm.xlu0 %499, %v41
    %v501 = vpop.permute.xlu0 %500
    %503 = vset.pattern.permute.xlu0 2
    %504 = vperm.xlu0 %503, %v42
    %v505 = vpop.permute.xlu0 %504
    %507 = vset.pattern.permute.xlu0 2
    %508 = vperm.xlu0 %507, %v43
    %v509 = vpop.permute.xlu0 %508
    %511 = vset.pattern.permute.xlu0 2
    %512 = vperm.xlu0 %511, %v44
    %v513 = vpop.permute.xlu0 %512
    %v515 = vadd.f32 %v451, %v485
    %v516 = vadd.f32 %v452, %v485
    %v517 = vadd.f32 %v453, %v485
    %v518 = vadd.f32 %v454, %v485
    %v519 = vadd.f32 %v455, %v489
    %v520 = vadd.f32 %v456, %v489
    %v521 = vadd.f32 %v457, %v489
    %v522 = vadd.f32 %v458, %v489
    %v523 = vadd.f32 %v459, %v493
    %v524 = vadd.f32 %v460, %v493
    %v525 = vadd.f32 %v461, %v493
    %v526 = vadd.f32 %v462, %v493
    %v527 = vadd.f32 %v463, %v497
    %v528 = vadd.f32 %v464, %v497
    %v529 = vadd.f32 %v465, %v497
    %v530 = vadd.f32 %v466, %v497
    %v531 = vadd.f32 %v467, %v501
    %v532 = vadd.f32 %v468, %v501
    %v533 = vadd.f32 %v469, %v501
    %v534 = vadd.f32 %v470, %v501
    %v535 = vadd.f32 %v471, %v505
    %v536 = vadd.f32 %v472, %v505
    %v537 = vadd.f32 %v473, %v505
    %v538 = vadd.f32 %v474, %v505
    %v539 = vadd.f32 %v475, %v509
    %v540 = vadd.f32 %v476, %v509
    %v541 = vadd.f32 %v477, %v509
    %v542 = vadd.f32 %v478, %v509
    %v543 = vadd.f32 %v479, %v513
    %v544 = vadd.f32 %v480, %v513
    %v545 = vadd.f32 %v481, %v513
    %v546 = vadd.f32 %v482, %v513
    %v547 = vmax.f32 %v515, 0.0
    %v548 = vmax.f32 %v516, 0.0
    %v549 = vmax.f32 %v517, 0.0
    %v550 = vmax.f32 %v518, 0.0
    %v551 = vmax.f32 %v519, 0.0
    %v552 = vmax.f32 %v520, 0.0
    %v553 = vmax.f32 %v521, 0.0
    %v554 = vmax.f32 %v522, 0.0
    %v555 = vmax.f32 %v523, 0.0
    %v556 = vmax.f32 %v524, 0.0
    %v557 = vmax.f32 %v525, 0.0
    %v558 = vmax.f32 %v526, 0.0
    %v559 = vmax.f32 %v527, 0.0
    %v560 = vmax.f32 %v528, 0.0
    %v561 = vmax.f32 %v529, 0.0
    %v562 = vmax.f32 %v530, 0.0
    %v563 = vmax.f32 %v531, 0.0
    %v564 = vmax.f32 %v532, 0.0
    %v565 = vmax.f32 %v533, 0.0
    %v566 = vmax.f32 %v534, 0.0
    %v567 = vmax.f32 %v535, 0.0
    %v568 = vmax.f32 %v536, 0.0
    %v569 = vmax.f32 %v537, 0.0
    %v570 = vmax.f32 %v538, 0.0
    %v571 = vmax.f32 %v539, 0.0
    %v572 = vmax.f32 %v540, 0.0
    %v573 = vmax.f32 %v541, 0.0
    %v574 = vmax.f32 %v542, 0.0
    %v575 = vmax.f32 %v543, 0.0
    %v576 = vmax.f32 %v544, 0.0
    %v577 = vmax.f32 %v545, 0.0
    %v578 = vmax.f32 %v546, 0.0
    %v579 = vld [vmem:[%s3] sm:$0xff]
    %v580 = vld [vmem:[%s3 + $0x8] sm:$0xff]
    %v581 = vld [vmem:[%s3 + $0x10] sm:$0xff]
    %v582 = vld [vmem:[%s3 + $0x18] sm:$0xff]
    %v583 = vld [vmem:[%s3 + $0x20] sm:$0xff]
    %v584 = vld [vmem:[%s3 + $0x28] sm:$0xff]
    %v585 = vld [vmem:[%s3 + $0x30] sm:$0xff]
    %v586 = vld [vmem:[%s3 + $0x38] sm:$0xff]
    %v587 = vld [vmem:[%s3 + $0x40] sm:$0xff]
    %v588 = vld [vmem:[%s3 + $0x48] sm:$0xff]
    %v589 = vld [vmem:[%s3 + $0x50] sm:$0xff]
    %v590 = vld [vmem:[%s3 + $0x58] sm:$0xff]
    %v591 = vld [vmem:[%s3 + $0x60] sm:$0xff]
    %v592 = vld [vmem:[%s3 + $0x68] sm:$0xff]
    %v593 = vld [vmem:[%s3 + $0x70] sm:$0xff]
    %v594 = vld [vmem:[%s3 + $0x78] sm:$0xff]
    %v595 = vld [vmem:[%s4] sm:$0xff]
    %v596 = vld [vmem:[%s4 + $0x8] sm:$0xff]
    %v597 = vld [vmem:[%s4 + $0x10] sm:$0xff]
    %v598 = vld [vmem:[%s4 + $0x18] sm:$0xff]
    %v599 = vld [vmem:[%s4 + $0x20] sm:$0xff]
    %v600 = vld [vmem:[%s4 + $0x28] sm:$0xff]
    %v601 = vld [vmem:[%s4 + $0x30] sm:$0xff]
    %v602 = vld [vmem:[%s4 + $0x38] sm:$0xff]
    %604 = vset.pattern.permute.xlu0 0
    %605 = vperm.xlu0 %604, %v595
    %v606 = vpop.permute.xlu0 %605
    %609 = vset.pattern.permute.xlu0 0
    %610 = vperm.xlu0 %609, %v596
    %v611 = vpop.permute.xlu0 %610
    %614 = vset.pattern.permute.xlu0 0
    %615 = vperm.xlu0 %614, %v597
    %v616 = vpop.permute.xlu0 %615
    %619 = vset.pattern.permute.xlu0 0
    %620 = vperm.xlu0 %619, %v598
    %v621 = vpop.permute.xlu0 %620
    %624 = vset.pattern.permute.xlu0 0
    %625 = vperm.xlu0 %624, %v599
    %v626 = vpop.permute.xlu0 %625
    %629 = vset.pattern.permute.xlu0 0
    %630 = vperm.xlu0 %629, %v600
    %v631 = vpop.permute.xlu0 %630
    %634 = vset.pattern.permute.xlu0 0
    %635 = vperm.xlu0 %634, %v601
    %v636 = vpop.permute.xlu0 %635
    %639 = vset.pattern.permute.xlu0 0
    %640 = vperm.xlu0 %639, %v602
    %v641 = vpop.permute.xlu0 %640
    %vm643 = vcmask 523264
    %v645 = vsel %vm643, %v580, 0
    %v648 = vsel %vm643, %v582, 0
    %v651 = vsel %vm643, %v584, 0
    %v654 = vsel %vm643, %v586, 0
    %v657 = vsel %vm643, %v588, 0
    %v660 = vsel %vm643, %v590, 0
    %v663 = vsel %vm643, %v592, 0
    %v666 = vsel %vm643, %v594, 0
    %668 = vmatpush.msra.mxu0 %v403
    %669 = vmatpush.msra.mxu0 %v399
    %670 = vmatpush.msra.mxu0 %v395
    %671 = vmatpush.msra.mxu0 %v391
    %672 = vmatpush.msra.mxu0 %v387
    %673 = vmatpush.msra.mxu0 %v383
    %674 = vmatpush.msra.mxu0 %v379
    %675 = vmatpush.msra.mxu0 %v375
    %676 = vmatpush.msra.mxu0 %v231
    %677 = vmatpush.msra.mxu0 %v227
    %678 = vmatpush.msra.mxu0 %v223
    %679 = vmatpush.msra.mxu0 %v219
    %680 = vmatpush.msra.mxu0 %v215
    %681 = vmatpush.msra.mxu0 %v211
    %682 = vmatpush.msra.mxu0 %v207
    %683 = vmatpush.msra.mxu0 %v203
    %684 = vmatmul.f32.gmra.mxu0 %v579
    %v685 = vpop.f32.mrf.mxu0
    %v686 = vadd.f32 %v606, %v685
    %687 = vmatmul.f32.gmra.mxu0 %v581
    %v688 = vpop.f32.mrf.mxu0
    %v689 = vadd.f32 %v611, %v688
    %690 = vmatmul.f32.gmra.mxu0 %v583
    %v691 = vpop.f32.mrf.mxu0
    %v692 = vadd.f32 %v616, %v691
    %693 = vmatmul.f32.gmra.mxu0 %v585
    %v694 = vpop.f32.mrf.mxu0
    %v695 = vadd.f32 %v621, %v694
    %696 = vmatmul.f32.gmra.mxu0 %v587
    %v697 = vpop.f32.mrf.mxu0
    %v698 = vadd.f32 %v626, %v697
    %699 = vmatmul.f32.gmra.mxu0 %v589
    %v700 = vpop.f32.mrf.mxu0
    %v701 = vadd.f32 %v631, %v700
    %702 = vmatmul.f32.gmra.mxu0 %v591
    %v703 = vpop.f32.mrf.mxu0
    %v704 = vadd.f32 %v636, %v703
    %705 = vmatmul.f32.gmra.mxu0 %v593
    %v706 = vpop.f32.mrf.mxu0
    %v707 = vadd.f32 %v641, %v706
    %708 = vdwg.mxu0
    %709 = vmatpush.msra.mxu0 0.0
    %710 = vmatpush.msra.mxu0 0.0
    %711 = vmatpush.msra.mxu0 0.0
    %712 = vmatpush.msra.mxu0 0.0
    %713 = vmatpush.msra.mxu0 0.0
    %714 = vmatpush.msra.mxu0 0.0
    %715 = vmatpush.msra.mxu0 0.0
    %716 = vmatpush.msra.mxu0 0.0
    %717 = vmatpush.msra.mxu0 %v575
    %718 = vmatpush.msra.mxu0 %v571
    %719 = vmatpush.msra.mxu0 %v567
    %720 = vmatpush.msra.mxu0 %v563
    %721 = vmatpush.msra.mxu0 %v559
    %722 = vmatpush.msra.mxu0 %v555
    %723 = vmatpush.msra.mxu0 %v551
    %724 = vmatpush.msra.mxu0 %v547
    %725 = vmatmul.f32.gmra.mxu0 %v645
    %v726 = vpop.f32.mrf.mxu0
    %v727 = vadd.f32 %v686, %v726
    %728 = vmatmul.f32.gmra.mxu0 %v648
    %v729 = vpop.f32.mrf.mxu0
    %v730 = vadd.f32 %v689, %v729
    %731 = vmatmul.f32.gmra.mxu0 %v651
    %v732 = vpop.f32.mrf.mxu0
    %v733 = vadd.f32 %v692, %v732
    %734 = vmatmul.f32.gmra.mxu0 %v654
    %v735 = vpop.f32.mrf.mxu0
    %v736 = vadd.f32 %v695, %v735
    %737 = vmatmul.f32.gmra.mxu0 %v657
    %v738 = vpop.f32.mrf.mxu0
    %v739 = vadd.f32 %v698, %v738
    %740 = vmatmul.f32.gmra.mxu0 %v660
    %v741 = vpop.f32.mrf.mxu0
    %v742 = vadd.f32 %v701, %v741
    %743 = vmatmul.f32.gmra.mxu0 %v663
    %v744 = vpop.f32.mrf.mxu0
    %v745 = vadd.f32 %v704, %v744
    %746 = vmatmul.f32.gmra.mxu0 %v666
    %v747 = vpop.f32.mrf.mxu0
    %v748 = vadd.f32 %v707, %v747
    %749 = vdwg.mxu0
    %750 = vmatpush.msra.mxu0 %v404
    %751 = vmatpush.msra.mxu0 %v400
    %752 = vmatpush.msra.mxu0 %v396
    %753 = vmatpush.msra.mxu0 %v392
    %754 = vmatpush.msra.mxu0 %v388
    %755 = vmatpush.msra.mxu0 %v384
    %756 = vmatpush.msra.mxu0 %v380
    %757 = vmatpush.msra.mxu0 %v376
    %758 = vmatpush.msra.mxu0 %v232
    %759 = vmatpush.msra.mxu0 %v228
    %760 = vmatpush.msra.mxu0 %v224
    %761 = vmatpush.msra.mxu0 %v220
    %762 = vmatpush.msra.mxu0 %v216
    %763 = vmatpush.msra.mxu0 %v212
    %764 = vmatpush.msra.mxu0 %v208
    %765 = vmatpush.msra.mxu0 %v204
    %766 = vmatmul.f32.gmra.mxu0 %v579
    %v767 = vpop.f32.mrf.mxu0
    %v768 = vadd.f32 %v606, %v767
    %769 = vmatmul.f32.gmra.mxu0 %v581
    %v770 = vpop.f32.mrf.mxu0
    %v771 = vadd.f32 %v611, %v770
    %772 = vmatmul.f32.gmra.mxu0 %v583
    %v773 = vpop.f32.mrf.mxu0
    %v774 = vadd.f32 %v616, %v773
    %775 = vmatmul.f32.gmra.mxu0 %v585
    %v776 = vpop.f32.mrf.mxu0
    %v777 = vadd.f32 %v621, %v776
    %778 = vmatmul.f32.gmra.mxu0 %v587
    %v779 = vpop.f32.mrf.mxu0
    %v780 = vadd.f32 %v626, %v779
    %781 = vmatmul.f32.gmra.mxu0 %v589
    %v782 = vpop.f32.mrf.mxu0
    %v783 = vadd.f32 %v631, %v782
    %784 = vmatmul.f32.gmra.mxu0 %v591
    %v785 = vpop.f32.mrf.mxu0
    %v786 = vadd.f32 %v636, %v785
    %787 = vmatmul.f32.gmra.mxu0 %v593
    %v788 = vpop.f32.mrf.mxu0
    %v789 = vadd.f32 %v641, %v788
    %790 = vdwg.mxu0
    %791 = vmatpush.msra.mxu0 0.0
    %792 = vmatpush.msra.mxu0 0.0
    %793 = vmatpush.msra.mxu0 0.0
    %794 = vmatpush.msra.mxu0 0.0
    %795 = vmatpush.msra.mxu0 0.0
    %796 = vmatpush.msra.mxu0 0.0
    %797 = vmatpush.msra.mxu0 0.0
    %798 = vmatpush.msra.mxu0 0.0
    %799 = vmatpush.msra.mxu0 %v576
    %800 = vmatpush.msra.mxu0 %v572
    %801 = vmatpush.msra.mxu0 %v568
    %802 = vmatpush.msra.mxu0 %v564
    %803 = vmatpush.msra.mxu0 %v560
    %804 = vmatpush.msra.mxu0 %v556
    %805 = vmatpush.msra.mxu0 %v552
    %806 = vmatpush.msra.mxu0 %v548
    %807 = vmatmul.f32.gmra.mxu0 %v645
    %v808 = vpop.f32.mrf.mxu0
    %v809 = vadd.f32 %v768, %v808
    %810 = vmatmul.f32.gmra.mxu0 %v648
    %v811 = vpop.f32.mrf.mxu0
    %v812 = vadd.f32 %v771, %v811
    %813 = vmatmul.f32.gmra.mxu0 %v651
    %v814 = vpop.f32.mrf.mxu0
    %v815 = vadd.f32 %v774, %v814
    %816 = vmatmul.f32.gmra.mxu0 %v654
    %v817 = vpop.f32.mrf.mxu0
    %v818 = vadd.f32 %v777, %v817
    %819 = vmatmul.f32.gmra.mxu0 %v657
    %v820 = vpop.f32.mrf.mxu0
    %v821 = vadd.f32 %v780, %v820
    %822 = vmatmul.f32.gmra.mxu0 %v660
    %v823 = vpop.f32.mrf.mxu0
    %v824 = vadd.f32 %v783, %v823
    %825 = vmatmul.f32.gmra.mxu0 %v663
    %v826 = vpop.f32.mrf.mxu0
    %v827 = vadd.f32 %v786, %v826
    %828 = vmatmul.f32.gmra.mxu0 %v666
    %v829 = vpop.f32.mrf.mxu0
    %v830 = vadd.f32 %v789, %v829
    %831 = vdwg.mxu0
    %832 = vmatpush.msra.mxu0 %v405
    %833 = vmatpush.msra.mxu0 %v401
    %834 = vmatpush.msra.mxu0 %v397
    %835 = vmatpush.msra.mxu0 %v393
    %836 = vmatpush.msra.mxu0 %v389
    %837 = vmatpush.msra.mxu0 %v385
    %838 = vmatpush.msra.mxu0 %v381
    %839 = vmatpush.msra.mxu0 %v377
    %840 = vmatpush.msra.mxu0 %v233
    %841 = vmatpush.msra.mxu0 %v229
    %842 = vmatpush.msra.mxu0 %v225
    %843 = vmatpush.msra.mxu0 %v221
    %844 = vmatpush.msra.mxu0 %v217
    %845 = vmatpush.msra.mxu0 %v213
    %846 = vmatpush.msra.mxu0 %v209
    %847 = vmatpush.msra.mxu0 %v205
    %848 = vmatmul.f32.gmra.mxu0 %v579
    %v849 = vpop.f32.mrf.mxu0
    %v850 = vadd.f32 %v606, %v849
    %851 = vmatmul.f32.gmra.mxu0 %v581
    %v852 = vpop.f32.mrf.mxu0
    %v853 = vadd.f32 %v611, %v852
    %854 = vmatmul.f32.gmra.mxu0 %v583
    %v855 = vpop.f32.mrf.mxu0
    %v856 = vadd.f32 %v616, %v855
    %857 = vmatmul.f32.gmra.mxu0 %v585
    %v858 = vpop.f32.mrf.mxu0
    %v859 = vadd.f32 %v621, %v858
    %860 = vmatmul.f32.gmra.mxu0 %v587
    %v861 = vpop.f32.mrf.mxu0
    %v862 = vadd.f32 %v626, %v861
    %863 = vmatmul.f32.gmra.mxu0 %v589
    %v864 = vpop.f32.mrf.mxu0
    %v865 = vadd.f32 %v631, %v864
    %866 = vmatmul.f32.gmra.mxu0 %v591
    %v867 = vpop.f32.mrf.mxu0
    %v868 = vadd.f32 %v636, %v867
    %869 = vmatmul.f32.gmra.mxu0 %v593
    %v870 = vpop.f32.mrf.mxu0
    %v871 = vadd.f32 %v641, %v870
    %872 = vdwg.mxu0
    %873 = vmatpush.msra.mxu0 0.0
    %874 = vmatpush.msra.mxu0 0.0
    %875 = vmatpush.msra.mxu0 0.0
    %876 = vmatpush.msra.mxu0 0.0
    %877 = vmatpush.msra.mxu0 0.0
    %878 = vmatpush.msra.mxu0 0.0
    %879 = vmatpush.msra.mxu0 0.0
    %880 = vmatpush.msra.mxu0 0.0
    %881 = vmatpush.msra.mxu0 %v577
    %882 = vmatpush.msra.mxu0 %v573
    %883 = vmatpush.msra.mxu0 %v569
    %884 = vmatpush.msra.mxu0 %v565
    %885 = vmatpush.msra.mxu0 %v561
    %886 = vmatpush.msra.mxu0 %v557
    %887 = vmatpush.msra.mxu0 %v553
    %888 = vmatpush.msra.mxu0 %v549
    %889 = vmatmul.f32.gmra.mxu0 %v645
    %v890 = vpop.f32.mrf.mxu0
    %v891 = vadd.f32 %v850, %v890
    %892 = vmatmul.f32.gmra.mxu0 %v648
    %v893 = vpop.f32.mrf.mxu0
    %v894 = vadd.f32 %v853, %v893
    %895 = vmatmul.f32.gmra.mxu0 %v651
    %v896 = vpop.f32.mrf.mxu0
    %v897 = vadd.f32 %v856, %v896
    %898 = vmatmul.f32.gmra.mxu0 %v654
    %v899 = vpop.f32.mrf.mxu0
    %v900 = vadd.f32 %v859, %v899
    %901 = vmatmul.f32.gmra.mxu0 %v657
    %v902 = vpop.f32.mrf.mxu0
    %v903 = vadd.f32 %v862, %v902
    %904 = vmatmul.f32.gmra.mxu0 %v660
    %v905 = vpop.f32.mrf.mxu0
    %v906 = vadd.f32 %v865, %v905
    %907 = vmatmul.f32.gmra.mxu0 %v663
    %v908 = vpop.f32.mrf.mxu0
    %v909 = vadd.f32 %v868, %v908
    %910 = vmatmul.f32.gmra.mxu0 %v666
    %v911 = vpop.f32.mrf.mxu0
    %v912 = vadd.f32 %v871, %v911
    %913 = vdwg.mxu0
    %914 = vmatpush.msra.mxu0 %v406
    %915 = vmatpush.msra.mxu0 %v402
    %916 = vmatpush.msra.mxu0 %v398
    %917 = vmatpush.msra.mxu0 %v394
    %918 = vmatpush.msra.mxu0 %v390
    %919 = vmatpush.msra.mxu0 %v386
    %920 = vmatpush.msra.mxu0 %v382
    %921 = vmatpush.msra.mxu0 %v378
    %922 = vmatpush.msra.mxu0 %v234
    %923 = vmatpush.msra.mxu0 %v230
    %924 = vmatpush.msra.mxu0 %v226
    %925 = vmatpush.msra.mxu0 %v222
    %926 = vmatpush.msra.mxu0 %v218
    %927 = vmatpush.msra.mxu0 %v214
    %928 = vmatpush.msra.mxu0 %v210
    %929 = vmatpush.msra.mxu0 %v206
    %930 = vmatmul.f32.gmra.mxu0 %v579
    %v931 = vpop.f32.mrf.mxu0
    %v932 = vadd.f32 %v606, %v931
    %933 = vmatmul.f32.gmra.mxu0 %v581
    %v934 = vpop.f32.mrf.mxu0
    %v935 = vadd.f32 %v611, %v934
    %936 = vmatmul.f32.gmra.mxu0 %v583
    %v937 = vpop.f32.mrf.mxu0
    %v938 = vadd.f32 %v616, %v937
    %939 = vmatmul.f32.gmra.mxu0 %v585
    %v940 = vpop.f32.mrf.mxu0
    %v941 = vadd.f32 %v621, %v940
    %942 = vmatmul.f32.gmra.mxu0 %v587
    %v943 = vpop.f32.mrf.mxu0
    %v944 = vadd.f32 %v626, %v943
    %945 = vmatmul.f32.gmra.mxu0 %v589
    %v946 = vpop.f32.mrf.mxu0
    %v947 = vadd.f32 %v631, %v946
    %948 = vmatmul.f32.gmra.mxu0 %v591
    %v949 = vpop.f32.mrf.mxu0
    %v950 = vadd.f32 %v636, %v949
    %951 = vmatmul.f32.gmra.mxu0 %v593
    %v952 = vpop.f32.mrf.mxu0
    %v953 = vadd.f32 %v641, %v952
    %954 = vdwg.mxu0
    %955 = vmatpush.msra.mxu0 0.0
    %956 = vmatpush.msra.mxu0 0.0
    %957 = vmatpush.msra.mxu0 0.0
    %958 = vmatpush.msra.mxu0 0.0
    %959 = vmatpush.msra.mxu0 0.0
    %960 = vmatpush.msra.mxu0 0.0
    %961 = vmatpush.msra.mxu0 0.0
    %962 = vmatpush.msra.mxu0 0.0
    %963 = vmatpush.msra.mxu0 %v578
    %964 = vmatpush.msra.mxu0 %v574
    %965 = vmatpush.msra.mxu0 %v570
    %966 = vmatpush.msra.mxu0 %v566
    %967 = vmatpush.msra.mxu0 %v562
    %968 = vmatpush.msra.mxu0 %v558
    %969 = vmatpush.msra.mxu0 %v554
    %970 = vmatpush.msra.mxu0 %v550
    %971 = vmatmul.f32.gmra.mxu0 %v645
    %v972 = vpop.f32.mrf.mxu0
    %v973 = vadd.f32 %v932, %v972
    %974 = vmatmul.f32.gmra.mxu0 %v648
    %v975 = vpop.f32.mrf.mxu0
    %v976 = vadd.f32 %v935, %v975
    %977 = vmatmul.f32.gmra.mxu0 %v651
    %v978 = vpop.f32.mrf.mxu0
    %v979 = vadd.f32 %v938, %v978
    %980 = vmatmul.f32.gmra.mxu0 %v654
    %v981 = vpop.f32.mrf.mxu0
    %v982 = vadd.f32 %v941, %v981
    %983 = vmatmul.f32.gmra.mxu0 %v657
    %v984 = vpop.f32.mrf.mxu0
    %v985 = vadd.f32 %v944, %v984
    %986 = vmatmul.f32.gmra.mxu0 %v660
    %v987 = vpop.f32.mrf.mxu0
    %v988 = vadd.f32 %v947, %v987
    %989 = vmatmul.f32.gmra.mxu0 %v663
    %v990 = vpop.f32.mrf.mxu0
    %v991 = vadd.f32 %v950, %v990
    %992 = vmatmul.f32.gmra.mxu0 %v666
    %v993 = vpop.f32.mrf.mxu0
    %v994 = vadd.f32 %v953, %v993
    %995 = vdwg.mxu0
    %v996 = vmax.f32 %v727, 0.0
    %v997 = vmax.f32 %v809, 0.0
    %v998 = vmax.f32 %v891, 0.0
    %v999 = vmax.f32 %v973, 0.0
    %v1000 = vmax.f32 %v730, 0.0
    %v1001 = vmax.f32 %v812, 0.0
    %v1002 = vmax.f32 %v894, 0.0
    %v1003 = vmax.f32 %v976, 0.0
    %v1004 = vmax.f32 %v733, 0.0
    %v1005 = vmax.f32 %v815, 0.0
    %v1006 = vmax.f32 %v897, 0.0
    %v1007 = vmax.f32 %v979, 0.0
    %v1008 = vmax.f32 %v736, 0.0
    %v1009 = vmax.f32 %v818, 0.0
    %v1010 = vmax.f32 %v900, 0.0
    %v1011 = vmax.f32 %v982, 0.0
    %v1012 = vmax.f32 %v739, 0.0
    %v1013 = vmax.f32 %v821, 0.0
    %v1014 = vmax.f32 %v903, 0.0
    %v1015 = vmax.f32 %v985, 0.0
    %v1016 = vmax.f32 %v742, 0.0
    %v1017 = vmax.f32 %v824, 0.0
    %v1018 = vmax.f32 %v906, 0.0
    %v1019 = vmax.f32 %v988, 0.0
    %v1020 = vmax.f32 %v745, 0.0
    %v1021 = vmax.f32 %v827, 0.0
    %v1022 = vmax.f32 %v909, 0.0
    %v1023 = vmax.f32 %v991, 0.0
    %v1024 = vmax.f32 %v748, 0.0
    %v1025 = vmax.f32 %v830, 0.0
    %v1026 = vmax.f32 %v912, 0.0
    %v1027 = vmax.f32 %v994, 0.0
    %v1028 = vld [vmem:[%s5] sm:$0xff]
    %v1029 = vld [vmem:[%s6] sm:$0xff]
    %1031 = vset.pattern.permute.xlu0 0
    %1032 = vperm.xlu0 %1031, %v1029
    %v1033 = vpop.permute.xlu0 %1032
    %v1036 = vsel %vm643, %v1028, 0
    %1038 = vmatpush.msra.mxu0 0.0
    %1039 = vmatpush.msra.mxu0 0.0
    %1040 = vmatpush.msra.mxu0 0.0
    %1041 = vmatpush.msra.mxu0 0.0
    %1042 = vmatpush.msra.mxu0 0.0
    %1043 = vmatpush.msra.mxu0 0.0
    %1044 = vmatpush.msra.mxu0 0.0
    %1045 = vmatpush.msra.mxu0 0.0
    %1046 = vmatpush.msra.mxu0 %v1024
    %1047 = vmatpush.msra.mxu0 %v1020
    %1048 = vmatpush.msra.mxu0 %v1016
    %1049 = vmatpush.msra.mxu0 %v1012
    %1050 = vmatpush.msra.mxu0 %v1008
    %1051 = vmatpush.msra.mxu0 %v1004
    %1052 = vmatpush.msra.mxu0 %v1000
    %1053 = vmatpush.msra.mxu0 %v996
    %1054 = vmatmul.f32.gmra.mxu0 %v1036
    %v1055 = vpop.f32.mrf.mxu0
    %v1056 = vadd.f32 %v1033, %v1055
    %1057 = vdwg.mxu0
    %1058 = vmatpush.msra.mxu0 0.0
    %1059 = vmatpush.msra.mxu0 0.0
    %1060 = vmatpush.msra.mxu0 0.0
    %1061 = vmatpush.msra.mxu0 0.0
    %1062 = vmatpush.msra.mxu0 0.0
    %1063 = vmatpush.msra.mxu0 0.0
    %1064 = vmatpush.msra.mxu0 0.0
    %1065 = vmatpush.msra.mxu0 0.0
    %1066 = vmatpush.msra.mxu0 %v1025
    %1067 = vmatpush.msra.mxu0 %v1021
    %1068 = vmatpush.msra.mxu0 %v1017
    %1069 = vmatpush.msra.mxu0 %v1013
    %1070 = vmatpush.msra.mxu0 %v1009
    %1071 = vmatpush.msra.mxu0 %v1005
    %1072 = vmatpush.msra.mxu0 %v1001
    %1073 = vmatpush.msra.mxu0 %v997
    %1074 = vmatmul.f32.gmra.mxu0 %v1036
    %v1075 = vpop.f32.mrf.mxu0
    %v1076 = vadd.f32 %v1033, %v1075
    %1077 = vdwg.mxu0
    %1078 = vmatpush.msra.mxu0 0.0
    %1079 = vmatpush.msra.mxu0 0.0
    %1080 = vmatpush.msra.mxu0 0.0
    %1081 = vmatpush.msra.mxu0 0.0
    %1082 = vmatpush.msra.mxu0 0.0
    %1083 = vmatpush.msra.mxu0 0.0
    %1084 = vmatpush.msra.mxu0 0.0
    %1085 = vmatpush.msra.mxu0 0.0
    %1086 = vmatpush.msra.mxu0 %v1026
    %1087 = vmatpush.msra.mxu0 %v1022
    %1088 = vmatpush.msra.mxu0 %v1018
    %1089 = vmatpush.msra.mxu0 %v1014
    %1090 = vmatpush.msra.mxu0 %v1010
    %1091 = vmatpush.msra.mxu0 %v1006
    %1092 = vmatpush.msra.mxu0 %v1002
    %1093 = vmatpush.msra.mxu0 %v998
    %1094 = vmatmul.f32.gmra.mxu0 %v1036
    %v1095 = vpop.f32.mrf.mxu0
    %v1096 = vadd.f32 %v1033, %v1095
    %1097 = vdwg.mxu0
    %1098 = vmatpush.msra.mxu0 0.0
    %1099 = vmatpush.msra.mxu0 0.0
    %1100 = vmatpush.msra.mxu0 0.0
    %1101 = vmatpush.msra.mxu0 0.0
    %1102 = vmatpush.msra.mxu0 0.0
    %1103 = vmatpush.msra.mxu0 0.0
    %1104 = vmatpush.msra.mxu0 0.0
    %1105 = vmatpush.msra.mxu0 0.0
    %1106 = vmatpush.msra.mxu0 %v1027
    %1107 = vmatpush.msra.mxu0 %v1023
    %1108 = vmatpush.msra.mxu0 %v1019
    %1109 = vmatpush.msra.mxu0 %v1015
    %1110 = vmatpush.msra.mxu0 %v1011
    %1111 = vmatpush.msra.mxu0 %v1007
    %1112 = vmatpush.msra.mxu0 %v1003
    %1113 = vmatpush.msra.mxu0 %v999
    %1114 = vmatmul.f32.gmra.mxu0 %v1036
    %v1115 = vpop.f32.mrf.mxu0
    %v1116 = vadd.f32 %v1033, %v1115
    %1117 = vdwg.mxu0
    %1118 = vst [vmem:[#allocation2] sm:$0xff] %v1056
    %1119 = vst [vmem:[#allocation2 + $0x8] sm:$0xff] %v1076
    %1120 = vst [vmem:[#allocation2 + $0x10] sm:$0xff] %v1096
    %1121 = vst [vmem:[#allocation2 + $0x18] sm:$0xff] %v1116
    // Predicated region
    $region30: #{_mlp3_forward_impl.1} parent=1 // pred_check
      _
    $region31: #{_mlp3_forward_impl.1} parent=1 // pred_check_branch
      %1123 = sbr.rel (0) target = $region33
    $region32: #{_mlp3_forward_impl.1} parent=1 // pred_region
      %1125 = vsyncadd [#allocation3], 0
      %s1127 = sshll.u32 [#allocation2], 4
      %s1128 = int_to_ptr.vmem [resolvable:$true] %s1127
      %s1129 = sshll.u32 %s7, 4
      %s1130 = int_to_ptr.hbm [resolvable:$true] %s1129
      %1132 = dma.vmem_to_hbm [thread:$0]  %s1128, 512, %s1130, [#allocation3]
    $region33: #{_mlp3_forward_impl.1} parent=1 // pred_fallthru
      _
    // Predicated region
    $region34: #{_mlp3_forward_impl.1} parent=1 // pred_check
      _
    $region35: #{_mlp3_forward_impl.1} parent=1 // pred_check_branch
      %1134 = sbr.rel (0) target = $region37
    $region36: #{_mlp3_forward_impl.1} parent=1 // pred_region
      %1136 = dma.done [#allocation3], 512
    $region37: #{_mlp3_forward_impl.1} parent=1 // pred_fallthru
      _
    %1137 = vsyncpa [#allocation3], 1

</llo_original>
